<compile_context>
chip_gen: v6e
topology: v6e:2x2x1
jax: 0.10.0
libtpu: 0.0.40
codegen_flags: <defaults>
</compile_context>

<pallas_src>
import math
import functools

import jax
import jax.numpy as jnp
from jax.experimental import pallas as pl
from jax.experimental.pallas import tpu as pltpu


def _round_up(x, m):
    return ((x + m - 1) // m) * m


def _gather_tile_kernel(ids_ref, table_hbm, o_ref, rows_vmem, sems, *, scale, tile):
    # ids_ref:   SMEM (N_pad,) int32  -- all token ids (scalar-prefetched once)
    # table_hbm: HBM  (V, E)          -- embedding table, never copied wholesale
    # o_ref:     VMEM (tile, E)       -- output tile for this grid step
    # rows_vmem: VMEM (tile, E)       -- gather landing buffer
    # sems:      DMA semaphores, shape (tile,)
    base = pl.program_id(0) * tile

    # Issue all row-gather DMAs for this tile; they are all in flight at once.
    for j in range(tile):
        row = ids_ref[base + j]
        pltpu.make_async_copy(
            table_hbm.at[pl.ds(row, 1), :],
            rows_vmem.at[pl.ds(j, 1), :],
            sems.at[j],
        ).start()

    # Wait for every row, then emit a single (tile, E) scaled store.
    for j in range(tile):
        pltpu.make_async_copy(
            table_hbm.at[pl.ds(0, 1), :],
            rows_vmem.at[pl.ds(j, 1), :],
            sems.at[j],
        ).wait()

    o_ref[...] = rows_vmem[...] * scale


def token_embedding(tokens, table, *, tile=8):
    """Pallas TPU equivalent of `nn.Embedding(vocab, emb)(tokens.long()) * sqrt(emb)`.

    tokens: integer array of any shape.  table: (vocab, emb) float array.
    Returns tokens.shape + (emb,) with table.dtype.  `tile` = rows gathered per
    grid step (sweep upward, e.g. 128+, for large token counts).
    """
    assert tile % 8 == 0
    vocab, emb = table.shape
    scale = float(math.sqrt(emb))

    ids = tokens.reshape(-1).astype(jnp.int32)
    # TODO(synk): PyTorch nn.Embedding raises on out-of-range ids; we clamp so the
    # row DMA stays in bounds (no clean in-kernel assert path on TPU).
    ids = jnp.clip(ids, 0, vocab - 1)
    n = ids.shape[0]
    n_pad = _round_up(max(n, 1), tile)
    ids_p = jnp.zeros((n_pad,), jnp.int32).at[:n].set(ids)  # padded ids read row 0, sliced off

    out = pl.pallas_call(
        functools.partial(_gather_tile_kernel, scale=scale, tile=tile),
        out_shape=jax.ShapeDtypeStruct((n_pad, emb), table.dtype),
        grid_spec=pltpu.PrefetchScalarGridSpec(
            num_scalar_prefetch=1,                      # ids -> SMEM, feed index math + DMA sources
            grid=(n_pad // tile,),
            in_specs=[pl.BlockSpec(memory_space=pl.ANY)],   # table stays in HBM, manual row DMAs
            out_specs=pl.BlockSpec((tile, emb), lambda i, ids: (i, 0)),
            scratch_shapes=[
                pltpu.VMEM((tile, emb), table.dtype),
                pltpu.SemaphoreType.DMA((tile,)),
            ],
        ),
        compiler_params=pltpu.CompilerParams(
            dimension_semantics=("parallel",),          # token tiles can shard across v7x's 2 TCs
        ),
    )(ids_p, table)

    return out[:n].reshape(tokens.shape + (emb,))


if __name__ == "__main__":
    VOCAB, EMB = 48, 32
    SEQ, BATCH = 8, 2

    key = jax.random.PRNGKey(0)
    k_tok, k_tab = jax.random.split(key)

    tokens = jax.random.randint(k_tok, (SEQ, BATCH), 0, VOCAB, dtype=jnp.int32)
    table = jax.random.normal(k_tab, (VOCAB, EMB), jnp.float32) * 0.02

    out = token_embedding(tokens, table, tile=8)   # 16 tokens -> grid=(2,)
    out = jax.block_until_ready(out)

    assert out.shape == (SEQ, BATCH, EMB), out.shape
    assert bool(jnp.all(jnp.isfinite(out)))

    # Reference: exact gather * sqrt(emb_size)  (matches the PyTorch module)
    ref = jnp.take(table, tokens, axis=0) * math.sqrt(EMB)
    err = float(jnp.max(jnp.abs(out - ref)))
    assert bool(jnp.allclose(out, ref, rtol=1e-6, atol=1e-6)), err

    print("KERNEL_OK")
</pallas_src>

<mosaic_0001>
module attributes {stable_mosaic.version = 11 : i64} {
  func.func @_gather_tile_kernel(%arg0: i32, %arg1: memref<16xi32, #tpu.memory_space<smem>>, %arg2: memref<48x32xf32, #tpu.memory_space<any>>, %arg3: memref<8x32xf32, #tpu.memory_space<vmem>>, %arg4: memref<8x32xf32, #tpu.memory_space<vmem>>, %arg5: memref<8x!tpu.dma_semaphore, #tpu.memory_space<semaphore_mem>>) attributes {dimension_semantics = [#tpu.dimension_semantics<parallel>], iteration_bounds = array<i64: 2>, scalar_prefetch = 1 : i64, scratch_operands = 2 : i64, tpu.core_type = #tpu.core_type<tc>, window_params = [{}, {transform_indices = @transform_1, window_bounds = array<i64: 8, 32>}]} {
    %c8_i32 = arith.constant 8 : i32
    %0 = arith.muli %arg0, %c8_i32 : i32
    %c0_i32 = arith.constant 0 : i32
    %1 = arith.addi %0, %c0_i32 : i32
    %2 = arith.index_cast %1 : i32 to index
    %3 = memref.load %arg1[%2] : memref<16xi32, #tpu.memory_space<smem>>
    %c0_i32_0 = arith.constant 0 : i32
    %c0_i32_1 = arith.constant 0 : i32
    %4 = tpu.memref_slice %arg2[%3, %c0_i32_1] : memref<48x32xf32, #tpu.memory_space<any>> -> memref<1x32xf32, #tpu.memory_space<any>>
    %c0_i32_2 = arith.constant 0 : i32
    %c0_i32_3 = arith.constant 0 : i32
    %5 = tpu.memref_slice %arg4[%c0_i32_2, %c0_i32_3] : memref<8x32xf32, #tpu.memory_space<vmem>> -> memref<1x32xf32, #tpu.memory_space<vmem>>
    %6 = tpu.memref_slice %arg5[%c0_i32_0] : memref<8x!tpu.dma_semaphore, #tpu.memory_space<semaphore_mem>> -> memref<1x!tpu.dma_semaphore, #tpu.memory_space<semaphore_mem>>
    %7 = tpu.memref_squeeze %6 : memref<1x!tpu.dma_semaphore, #tpu.memory_space<semaphore_mem>> -> memref<!tpu.dma_semaphore, #tpu.memory_space<semaphore_mem>>
    tpu.enqueue_dma source(%4 : memref<1x32xf32, #tpu.memory_space<any>>) target(%5 : memref<1x32xf32, #tpu.memory_space<vmem>>) target_semaphore(%7 : memref<!tpu.dma_semaphore, #tpu.memory_space<semaphore_mem>>)
    %c1_i32 = arith.constant 1 : i32
    %8 = arith.addi %0, %c1_i32 : i32
    %9 = arith.index_cast %8 : i32 to index
    %10 = memref.load %arg1[%9] : memref<16xi32, #tpu.memory_space<smem>>
    %c1_i32_4 = arith.constant 1 : i32
    %c0_i32_5 = arith.constant 0 : i32
    %11 = tpu.memref_slice %arg2[%10, %c0_i32_5] : memref<48x32xf32, #tpu.memory_space<any>> -> memref<1x32xf32, #tpu.memory_space<any>>
    %c1_i32_6 = arith.constant 1 : i32
    %c0_i32_7 = arith.constant 0 : i32
    %12 = tpu.memref_slice %arg4[%c1_i32_6, %c0_i32_7] : memref<8x32xf32, #tpu.memory_space<vmem>> -> memref<1x32xf32, #tpu.memory_space<vmem>>
    %13 = tpu.memref_slice %arg5[%c1_i32_4] : memref<8x!tpu.dma_semaphore, #tpu.memory_space<semaphore_mem>> -> memref<1x!tpu.dma_semaphore, #tpu.memory_space<semaphore_mem>>
    %14 = tpu.memref_squeeze %13 : memref<1x!tpu.dma_semaphore, #tpu.memory_space<semaphore_mem>> -> memref<!tpu.dma_semaphore, #tpu.memory_space<semaphore_mem>>
    tpu.enqueue_dma source(%11 : memref<1x32xf32, #tpu.memory_space<any>>) target(%12 : memref<1x32xf32, #tpu.memory_space<vmem>>) target_semaphore(%14 : memref<!tpu.dma_semaphore, #tpu.memory_space<semaphore_mem>>)
    %c2_i32 = arith.constant 2 : i32
    %15 = arith.addi %0, %c2_i32 : i32
    %16 = arith.index_cast %15 : i32 to index
    %17 = memref.load %arg1[%16] : memref<16xi32, #tpu.memory_space<smem>>
    %c2_i32_8 = arith.constant 2 : i32
    %c0_i32_9 = arith.constant 0 : i32
    %18 = tpu.memref_slice %arg2[%17, %c0_i32_9] : memref<48x32xf32, #tpu.memory_space<any>> -> memref<1x32xf32, #tpu.memory_space<any>>
    %c2_i32_10 = arith.constant 2 : i32
    %c0_i32_11 = arith.constant 0 : i32
    %19 = tpu.memref_slice %arg4[%c2_i32_10, %c0_i32_11] : memref<8x32xf32, #tpu.memory_space<vmem>> -> memref<1x32xf32, #tpu.memory_space<vmem>>
    %20 = tpu.memref_slice %arg5[%c2_i32_8] : memref<8x!tpu.dma_semaphore, #tpu.memory_space<semaphore_mem>> -> memref<1x!tpu.dma_semaphore, #tpu.memory_space<semaphore_mem>>
    %21 = tpu.memref_squeeze %20 : memref<1x!tpu.dma_semaphore, #tpu.memory_space<semaphore_mem>> -> memref<!tpu.dma_semaphore, #tpu.memory_space<semaphore_mem>>
    tpu.enqueue_dma source(%18 : memref<1x32xf32, #tpu.memory_space<any>>) target(%19 : memref<1x32xf32, #tpu.memory_space<vmem>>) target_semaphore(%21 : memref<!tpu.dma_semaphore, #tpu.memory_space<semaphore_mem>>)
    %c3_i32 = arith.constant 3 : i32
    %22 = arith.addi %0, %c3_i32 : i32
    %23 = arith.index_cast %22 : i32 to index
    %24 = memref.load %arg1[%23] : memref<16xi32, #tpu.memory_space<smem>>
    %c3_i32_12 = arith.constant 3 : i32
    %c0_i32_13 = arith.constant 0 : i32
    %25 = tpu.memref_slice %arg2[%24, %c0_i32_13] : memref<48x32xf32, #tpu.memory_space<any>> -> memref<1x32xf32, #tpu.memory_space<any>>
    %c3_i32_14 = arith.constant 3 : i32
    %c0_i32_15 = arith.constant 0 : i32
    %26 = tpu.memref_slice %arg4[%c3_i32_14, %c0_i32_15] : memref<8x32xf32, #tpu.memory_space<vmem>> -> memref<1x32xf32, #tpu.memory_space<vmem>>
    %27 = tpu.memref_slice %arg5[%c3_i32_12] : memref<8x!tpu.dma_semaphore, #tpu.memory_space<semaphore_mem>> -> memref<1x!tpu.dma_semaphore, #tpu.memory_space<semaphore_mem>>
    %28 = tpu.memref_squeeze %27 : memref<1x!tpu.dma_semaphore, #tpu.memory_space<semaphore_mem>> -> memref<!tpu.dma_semaphore, #tpu.memory_space<semaphore_mem>>
    tpu.enqueue_dma source(%25 : memref<1x32xf32, #tpu.memory_space<any>>) target(%26 : memref<1x32xf32, #tpu.memory_space<vmem>>) target_semaphore(%28 : memref<!tpu.dma_semaphore, #tpu.memory_space<semaphore_mem>>)
    %c4_i32 = arith.constant 4 : i32
    %29 = arith.addi %0, %c4_i32 : i32
    %30 = arith.index_cast %29 : i32 to index
    %31 = memref.load %arg1[%30] : memref<16xi32, #tpu.memory_space<smem>>
    %c4_i32_16 = arith.constant 4 : i32
    %c0_i32_17 = arith.constant 0 : i32
    %32 = tpu.memref_slice %arg2[%31, %c0_i32_17] : memref<48x32xf32, #tpu.memory_space<any>> -> memref<1x32xf32, #tpu.memory_space<any>>
    %c4_i32_18 = arith.constant 4 : i32
    %c0_i32_19 = arith.constant 0 : i32
    %33 = tpu.memref_slice %arg4[%c4_i32_18, %c0_i32_19] : memref<8x32xf32, #tpu.memory_space<vmem>> -> memref<1x32xf32, #tpu.memory_space<vmem>>
    %34 = tpu.memref_slice %arg5[%c4_i32_16] : memref<8x!tpu.dma_semaphore, #tpu.memory_space<semaphore_mem>> -> memref<1x!tpu.dma_semaphore, #tpu.memory_space<semaphore_mem>>
    %35 = tpu.memref_squeeze %34 : memref<1x!tpu.dma_semaphore, #tpu.memory_space<semaphore_mem>> -> memref<!tpu.dma_semaphore, #tpu.memory_space<semaphore_mem>>
    tpu.enqueue_dma source(%32 : memref<1x32xf32, #tpu.memory_space<any>>) target(%33 : memref<1x32xf32, #tpu.memory_space<vmem>>) target_semaphore(%35 : memref<!tpu.dma_semaphore, #tpu.memory_space<semaphore_mem>>)
    %c5_i32 = arith.constant 5 : i32
    %36 = arith.addi %0, %c5_i32 : i32
    %37 = arith.index_cast %36 : i32 to index
    %38 = memref.load %arg1[%37] : memref<16xi32, #tpu.memory_space<smem>>
    %c5_i32_20 = arith.constant 5 : i32
    %c0_i32_21 = arith.constant 0 : i32
    %39 = tpu.memref_slice %arg2[%38, %c0_i32_21] : memref<48x32xf32, #tpu.memory_space<any>> -> memref<1x32xf32, #tpu.memory_space<any>>
    %c5_i32_22 = arith.constant 5 : i32
    %c0_i32_23 = arith.constant 0 : i32
    %40 = tpu.memref_slice %arg4[%c5_i32_22, %c0_i32_23] : memref<8x32xf32, #tpu.memory_space<vmem>> -> memref<1x32xf32, #tpu.memory_space<vmem>>
    %41 = tpu.memref_slice %arg5[%c5_i32_20] : memref<8x!tpu.dma_semaphore, #tpu.memory_space<semaphore_mem>> -> memref<1x!tpu.dma_semaphore, #tpu.memory_space<semaphore_mem>>
    %42 = tpu.memref_squeeze %41 : memref<1x!tpu.dma_semaphore, #tpu.memory_space<semaphore_mem>> -> memref<!tpu.dma_semaphore, #tpu.memory_space<semaphore_mem>>
    tpu.enqueue_dma source(%39 : memref<1x32xf32, #tpu.memory_space<any>>) target(%40 : memref<1x32xf32, #tpu.memory_space<vmem>>) target_semaphore(%42 : memref<!tpu.dma_semaphore, #tpu.memory_space<semaphore_mem>>)
    %c6_i32 = arith.constant 6 : i32
    %43 = arith.addi %0, %c6_i32 : i32
    %44 = arith.index_cast %43 : i32 to index
    %45 = memref.load %arg1[%44] : memref<16xi32, #tpu.memory_space<smem>>
    %c6_i32_24 = arith.constant 6 : i32
    %c0_i32_25 = arith.constant 0 : i32
    %46 = tpu.memref_slice %arg2[%45, %c0_i32_25] : memref<48x32xf32, #tpu.memory_space<any>> -> memref<1x32xf32, #tpu.memory_space<any>>
    %c6_i32_26 = arith.constant 6 : i32
    %c0_i32_27 = arith.constant 0 : i32
    %47 = tpu.memref_slice %arg4[%c6_i32_26, %c0_i32_27] : memref<8x32xf32, #tpu.memory_space<vmem>> -> memref<1x32xf32, #tpu.memory_space<vmem>>
    %48 = tpu.memref_slice %arg5[%c6_i32_24] : memref<8x!tpu.dma_semaphore, #tpu.memory_space<semaphore_mem>> -> memref<1x!tpu.dma_semaphore, #tpu.memory_space<semaphore_mem>>
    %49 = tpu.memref_squeeze %48 : memref<1x!tpu.dma_semaphore, #tpu.memory_space<semaphore_mem>> -> memref<!tpu.dma_semaphore, #tpu.memory_space<semaphore_mem>>
    tpu.enqueue_dma source(%46 : memref<1x32xf32, #tpu.memory_space<any>>) target(%47 : memref<1x32xf32, #tpu.memory_space<vmem>>) target_semaphore(%49 : memref<!tpu.dma_semaphore, #tpu.memory_space<semaphore_mem>>)
    %c7_i32 = arith.constant 7 : i32
    %50 = arith.addi %0, %c7_i32 : i32
    %51 = arith.index_cast %50 : i32 to index
    %52 = memref.load %arg1[%51] : memref<16xi32, #tpu.memory_space<smem>>
    %c7_i32_28 = arith.constant 7 : i32
    %c0_i32_29 = arith.constant 0 : i32
    %53 = tpu.memref_slice %arg2[%52, %c0_i32_29] : memref<48x32xf32, #tpu.memory_space<any>> -> memref<1x32xf32, #tpu.memory_space<any>>
    %c7_i32_30 = arith.constant 7 : i32
    %c0_i32_31 = arith.constant 0 : i32
    %54 = tpu.memref_slice %arg4[%c7_i32_30, %c0_i32_31] : memref<8x32xf32, #tpu.memory_space<vmem>> -> memref<1x32xf32, #tpu.memory_space<vmem>>
    %55 = tpu.memref_slice %arg5[%c7_i32_28] : memref<8x!tpu.dma_semaphore, #tpu.memory_space<semaphore_mem>> -> memref<1x!tpu.dma_semaphore, #tpu.memory_space<semaphore_mem>>
    %56 = tpu.memref_squeeze %55 : memref<1x!tpu.dma_semaphore, #tpu.memory_space<semaphore_mem>> -> memref<!tpu.dma_semaphore, #tpu.memory_space<semaphore_mem>>
    tpu.enqueue_dma source(%53 : memref<1x32xf32, #tpu.memory_space<any>>) target(%54 : memref<1x32xf32, #tpu.memory_space<vmem>>) target_semaphore(%56 : memref<!tpu.dma_semaphore, #tpu.memory_space<semaphore_mem>>)
    %c0_i32_32 = arith.constant 0 : i32
    %c0_i32_33 = arith.constant 0 : i32
    %c0_i32_34 = arith.constant 0 : i32
    %57 = tpu.memref_slice %arg2[%c0_i32_33, %c0_i32_34] : memref<48x32xf32, #tpu.memory_space<any>> -> memref<1x32xf32, #tpu.memory_space<any>>
    %c0_i32_35 = arith.constant 0 : i32
    %c0_i32_36 = arith.constant 0 : i32
    %58 = tpu.memref_slice %arg4[%c0_i32_35, %c0_i32_36] : memref<8x32xf32, #tpu.memory_space<vmem>> -> memref<1x32xf32, #tpu.memory_space<vmem>>
    %59 = tpu.memref_slice %arg5[%c0_i32_32] : memref<8x!tpu.dma_semaphore, #tpu.memory_space<semaphore_mem>> -> memref<1x!tpu.dma_semaphore, #tpu.memory_space<semaphore_mem>>
    %60 = tpu.memref_squeeze %59 : memref<1x!tpu.dma_semaphore, #tpu.memory_space<semaphore_mem>> -> memref<!tpu.dma_semaphore, #tpu.memory_space<semaphore_mem>>
    tpu.wait_dma2 semaphore(%60 : memref<!tpu.dma_semaphore, #tpu.memory_space<semaphore_mem>>) src(%57 : memref<1x32xf32, #tpu.memory_space<any>>) dst(%58 : memref<1x32xf32, #tpu.memory_space<vmem>>)
    %c1_i32_37 = arith.constant 1 : i32
    %c0_i32_38 = arith.constant 0 : i32
    %c0_i32_39 = arith.constant 0 : i32
    %61 = tpu.memref_slice %arg2[%c0_i32_38, %c0_i32_39] : memref<48x32xf32, #tpu.memory_space<any>> -> memref<1x32xf32, #tpu.memory_space<any>>
    %c1_i32_40 = arith.constant 1 : i32
    %c0_i32_41 = arith.constant 0 : i32
    %62 = tpu.memref_slice %arg4[%c1_i32_40, %c0_i32_41] : memref<8x32xf32, #tpu.memory_space<vmem>> -> memref<1x32xf32, #tpu.memory_space<vmem>>
    %63 = tpu.memref_slice %arg5[%c1_i32_37] : memref<8x!tpu.dma_semaphore, #tpu.memory_space<semaphore_mem>> -> memref<1x!tpu.dma_semaphore, #tpu.memory_space<semaphore_mem>>
    %64 = tpu.memref_squeeze %63 : memref<1x!tpu.dma_semaphore, #tpu.memory_space<semaphore_mem>> -> memref<!tpu.dma_semaphore, #tpu.memory_space<semaphore_mem>>
    tpu.wait_dma2 semaphore(%64 : memref<!tpu.dma_semaphore, #tpu.memory_space<semaphore_mem>>) src(%61 : memref<1x32xf32, #tpu.memory_space<any>>) dst(%62 : memref<1x32xf32, #tpu.memory_space<vmem>>)
    %c2_i32_42 = arith.constant 2 : i32
    %c0_i32_43 = arith.constant 0 : i32
    %c0_i32_44 = arith.constant 0 : i32
    %65 = tpu.memref_slice %arg2[%c0_i32_43, %c0_i32_44] : memref<48x32xf32, #tpu.memory_space<any>> -> memref<1x32xf32, #tpu.memory_space<any>>
    %c2_i32_45 = arith.constant 2 : i32
    %c0_i32_46 = arith.constant 0 : i32
    %66 = tpu.memref_slice %arg4[%c2_i32_45, %c0_i32_46] : memref<8x32xf32, #tpu.memory_space<vmem>> -> memref<1x32xf32, #tpu.memory_space<vmem>>
    %67 = tpu.memref_slice %arg5[%c2_i32_42] : memref<8x!tpu.dma_semaphore, #tpu.memory_space<semaphore_mem>> -> memref<1x!tpu.dma_semaphore, #tpu.memory_space<semaphore_mem>>
    %68 = tpu.memref_squeeze %67 : memref<1x!tpu.dma_semaphore, #tpu.memory_space<semaphore_mem>> -> memref<!tpu.dma_semaphore, #tpu.memory_space<semaphore_mem>>
    tpu.wait_dma2 semaphore(%68 : memref<!tpu.dma_semaphore, #tpu.memory_space<semaphore_mem>>) src(%65 : memref<1x32xf32, #tpu.memory_space<any>>) dst(%66 : memref<1x32xf32, #tpu.memory_space<vmem>>)
    %c3_i32_47 = arith.constant 3 : i32
    %c0_i32_48 = arith.constant 0 : i32
    %c0_i32_49 = arith.constant 0 : i32
    %69 = tpu.memref_slice %arg2[%c0_i32_48, %c0_i32_49] : memref<48x32xf32, #tpu.memory_space<any>> -> memref<1x32xf32, #tpu.memory_space<any>>
    %c3_i32_50 = arith.constant 3 : i32
    %c0_i32_51 = arith.constant 0 : i32
    %70 = tpu.memref_slice %arg4[%c3_i32_50, %c0_i32_51] : memref<8x32xf32, #tpu.memory_space<vmem>> -> memref<1x32xf32, #tpu.memory_space<vmem>>
    %71 = tpu.memref_slice %arg5[%c3_i32_47] : memref<8x!tpu.dma_semaphore, #tpu.memory_space<semaphore_mem>> -> memref<1x!tpu.dma_semaphore, #tpu.memory_space<semaphore_mem>>
    %72 = tpu.memref_squeeze %71 : memref<1x!tpu.dma_semaphore, #tpu.memory_space<semaphore_mem>> -> memref<!tpu.dma_semaphore, #tpu.memory_space<semaphore_mem>>
    tpu.wait_dma2 semaphore(%72 : memref<!tpu.dma_semaphore, #tpu.memory_space<semaphore_mem>>) src(%69 : memref<1x32xf32, #tpu.memory_space<any>>) dst(%70 : memref<1x32xf32, #tpu.memory_space<vmem>>)
    %c4_i32_52 = arith.constant 4 : i32
    %c0_i32_53 = arith.constant 0 : i32
    %c0_i32_54 = arith.constant 0 : i32
    %73 = tpu.memref_slice %arg2[%c0_i32_53, %c0_i32_54] : memref<48x32xf32, #tpu.memory_space<any>> -> memref<1x32xf32, #tpu.memory_space<any>>
    %c4_i32_55 = arith.constant 4 : i32
    %c0_i32_56 = arith.constant 0 : i32
    %74 = tpu.memref_slice %arg4[%c4_i32_55, %c0_i32_56] : memref<8x32xf32, #tpu.memory_space<vmem>> -> memref<1x32xf32, #tpu.memory_space<vmem>>
    %75 = tpu.memref_slice %arg5[%c4_i32_52] : memref<8x!tpu.dma_semaphore, #tpu.memory_space<semaphore_mem>> -> memref<1x!tpu.dma_semaphore, #tpu.memory_space<semaphore_mem>>
    %76 = tpu.memref_squeeze %75 : memref<1x!tpu.dma_semaphore, #tpu.memory_space<semaphore_mem>> -> memref<!tpu.dma_semaphore, #tpu.memory_space<semaphore_mem>>
    tpu.wait_dma2 semaphore(%76 : memref<!tpu.dma_semaphore, #tpu.memory_space<semaphore_mem>>) src(%73 : memref<1x32xf32, #tpu.memory_space<any>>) dst(%74 : memref<1x32xf32, #tpu.memory_space<vmem>>)
    %c5_i32_57 = arith.constant 5 : i32
    %c0_i32_58 = arith.constant 0 : i32
    %c0_i32_59 = arith.constant 0 : i32
    %77 = tpu.memref_slice %arg2[%c0_i32_58, %c0_i32_59] : memref<48x32xf32, #tpu.memory_space<any>> -> memref<1x32xf32, #tpu.memory_space<any>>
    %c5_i32_60 = arith.constant 5 : i32
    %c0_i32_61 = arith.constant 0 : i32
    %78 = tpu.memref_slice %arg4[%c5_i32_60, %c0_i32_61] : memref<8x32xf32, #tpu.memory_space<vmem>> -> memref<1x32xf32, #tpu.memory_space<vmem>>
    %79 = tpu.memref_slice %arg5[%c5_i32_57] : memref<8x!tpu.dma_semaphore, #tpu.memory_space<semaphore_mem>> -> memref<1x!tpu.dma_semaphore, #tpu.memory_space<semaphore_mem>>
    %80 = tpu.memref_squeeze %79 : memref<1x!tpu.dma_semaphore, #tpu.memory_space<semaphore_mem>> -> memref<!tpu.dma_semaphore, #tpu.memory_space<semaphore_mem>>
    tpu.wait_dma2 semaphore(%80 : memref<!tpu.dma_semaphore, #tpu.memory_space<semaphore_mem>>) src(%77 : memref<1x32xf32, #tpu.memory_space<any>>) dst(%78 : memref<1x32xf32, #tpu.memory_space<vmem>>)
    %c6_i32_62 = arith.constant 6 : i32
    %c0_i32_63 = arith.constant 0 : i32
    %c0_i32_64 = arith.constant 0 : i32
    %81 = tpu.memref_slice %arg2[%c0_i32_63, %c0_i32_64] : memref<48x32xf32, #tpu.memory_space<any>> -> memref<1x32xf32, #tpu.memory_space<any>>
    %c6_i32_65 = arith.constant 6 : i32
    %c0_i32_66 = arith.constant 0 : i32
    %82 = tpu.memref_slice %arg4[%c6_i32_65, %c0_i32_66] : memref<8x32xf32, #tpu.memory_space<vmem>> -> memref<1x32xf32, #tpu.memory_space<vmem>>
    %83 = tpu.memref_slice %arg5[%c6_i32_62] : memref<8x!tpu.dma_semaphore, #tpu.memory_space<semaphore_mem>> -> memref<1x!tpu.dma_semaphore, #tpu.memory_space<semaphore_mem>>
    %84 = tpu.memref_squeeze %83 : memref<1x!tpu.dma_semaphore, #tpu.memory_space<semaphore_mem>> -> memref<!tpu.dma_semaphore, #tpu.memory_space<semaphore_mem>>
    tpu.wait_dma2 semaphore(%84 : memref<!tpu.dma_semaphore, #tpu.memory_space<semaphore_mem>>) src(%81 : memref<1x32xf32, #tpu.memory_space<any>>) dst(%82 : memref<1x32xf32, #tpu.memory_space<vmem>>)
    %c7_i32_67 = arith.constant 7 : i32
    %c0_i32_68 = arith.constant 0 : i32
    %c0_i32_69 = arith.constant 0 : i32
    %85 = tpu.memref_slice %arg2[%c0_i32_68, %c0_i32_69] : memref<48x32xf32, #tpu.memory_space<any>> -> memref<1x32xf32, #tpu.memory_space<any>>
    %c7_i32_70 = arith.constant 7 : i32
    %c0_i32_71 = arith.constant 0 : i32
    %86 = tpu.memref_slice %arg4[%c7_i32_70, %c0_i32_71] : memref<8x32xf32, #tpu.memory_space<vmem>> -> memref<1x32xf32, #tpu.memory_space<vmem>>
    %87 = tpu.memref_slice %arg5[%c7_i32_67] : memref<8x!tpu.dma_semaphore, #tpu.memory_space<semaphore_mem>> -> memref<1x!tpu.dma_semaphore, #tpu.memory_space<semaphore_mem>>
    %88 = tpu.memref_squeeze %87 : memref<1x!tpu.dma_semaphore, #tpu.memory_space<semaphore_mem>> -> memref<!tpu.dma_semaphore, #tpu.memory_space<semaphore_mem>>
    tpu.wait_dma2 semaphore(%88 : memref<!tpu.dma_semaphore, #tpu.memory_space<semaphore_mem>>) src(%85 : memref<1x32xf32, #tpu.memory_space<any>>) dst(%86 : memref<1x32xf32, #tpu.memory_space<vmem>>)
    %c0 = arith.constant 0 : index
    %c0_72 = arith.constant 0 : index
    %89 = vector.load %arg4[%c0, %c0_72] : memref<8x32xf32, #tpu.memory_space<vmem>>, vector<8x32xf32>
    %cst = arith.constant 5.65685415 : f32
    %90 = vector.broadcast %cst : f32 to vector<8x32xf32>
    %91 = arith.mulf %89, %90 : vector<8x32xf32>
    %c0_73 = arith.constant 0 : index
    %c0_74 = arith.constant 0 : index
    %92 = vector.load %arg3[%c0_73, %c0_74] : memref<8x32xf32, #tpu.memory_space<vmem>>, vector<8x32xf32>
    tpu.vector_store %arg3[%c0_73, %c0_74], %91 {strides = array<i32>} : memref<8x32xf32, #tpu.memory_space<vmem>>, vector<8x32xf32>,
    return
  }
  func.func @transform_1(%arg0: i32, %arg1: memref<16xi32, #tpu.memory_space<smem>>) -> (i32, i32) {
    %c0_i32 = arith.constant 0 : i32
    %c0_i32_0 = arith.constant 0 : i32
    return %arg0, %c0_i32 : i32, i32
  }
}

</mosaic_0001>

<llo_original>
// kernel: tpu_custom_call.1
$region0: #{tpu_custom_call.1}
  #allocation0 [shape = 'u32[]', space=smem, size = 0x4, offset = 0x4, fixed_abs, tag = 'smem constant byte address 0x4 - core index']
  #allocation1 [shape = 'u32[144,128]{1,0:T(1,128)}', space=vmem, size = 0x12000, scoped, tag = 'internal scratch']
  #allocation2 [shape = 'f32[8,32]{1,0:T(8,128)}', space=vmem, size = 0x1000, scoped, tag = 'scratch operand']
  #allocation3 [shape = 's32[8]{0}', space=sflag, size = 0x20, scoped, tag = 'scratch operand']
  #allocation4 [shape = 's32[1]{0}', space=sflag, size = 0x4, scoped, tag = 'scoped memory for tpu_custom_call.1']
  #allocation5 [shape = 'u8[512]{0}', space=smem, size = 0x200, scoped, tag = 'prefetched SMEM operand 0']
  #allocation8 [shape = 's32[]', space=sflag, size = 0x4, offset = 0, fixed_abs, tag = 'sflag constant byte address 0x0 - dummy sync flag']
  #allocation9 [shape = 's32[]', space=sflag, size = 0x4, offset = 0, fixed_abs, tag = 'sflag constant byte address 0x0 - dummy sync flag']
  #allocation10 [shape = 's32[]', space=sflag, size = 0x4, offset = 0, fixed_abs, tag = 'sflag constant byte address 0x0 - dummy sync flag']
  #allocation11 [shape = 's32[]', space=sflag, size = 0x4, offset = 0, fixed_abs, tag = 'sflag constant byte address 0x0 - dummy sync flag']
  #allocation12 [shape = 's32[]', space=sflag, size = 0x4, offset = 0, fixed_abs, tag = 'sflag constant byte address 0x0 - dummy sync flag']
  #allocation13 [shape = 's32[]', space=sflag, size = 0x4, offset = 0, fixed_abs, tag = 'sflag constant byte address 0x0 - dummy sync flag']
  #allocation14 [shape = 's32[]', space=sflag, size = 0x4, offset = 0, fixed_abs, tag = 'sflag constant byte address 0x0 - dummy sync flag']
  #allocation15 [shape = 's32[]', space=sflag, size = 0x4, offset = 0, fixed_abs, tag = 'sflag constant byte address 0x0 - dummy sync flag']
  %s0 = inlined_call_operand.vmem [shape: s32[16], index: 0, kind: input, shape index: {}]
  %s1 = inlined_call_operand.vmem [shape: f32[48,32], index: 1, kind: input, shape index: {}]
  %s2 = inlined_call_operand.hbm [shape: f32[16,32], index: 2, kind: output, shape index: {}]
  %s3 = sld [smem:[#allocation0]]
  $region265: #{tpu_custom_call.1} parent=0
    _
  %s5 = ssub.s32 1, %s3
  %s6 = scalar_select 0, %s5, %s3
  %s7 = sshll.u32 %s0, 4
  %s8 = int_to_ptr.vmem [resolvable:$true] %s7
  %10 = dma.vmem_to_smem %s8, 16, [#allocation5], [#allocation4]
  %11 = dma.done [#allocation4], 16
  %12 = sfence
  $region1: #{tpu_custom_call.1} parent=0
    #allocation6 [shape = 'u8[8192]{0}', space=vmem, size = 0x2000, scoped, tag = 'output window, operand 0']
    #allocation7 [shape = 's32[2]{0}', space=sflag, size = 0x8, scoped, tag = 'scoped memory for tpu_custom_call.1']
    %13 = vsyncpa [#allocation7], 0
    %s14 = scalar_lea.sflag [#allocation7], 1
    %15 = vsyncpa %s14, 0
    loop: start=0, step=1, limit=3
    $region2: #{tpu_custom_call.1} parent=1 // loop_pre_header
      _
    $region3: #{tpu_custom_call.1} parent=1 // loop_header
      %s17 = sphi 0, %s21
      %p18 = scmp.ge.s32.totalorder %s17, 3
      %s26 = sphi 0, %s28
      %s29 = sphi 0, %s26
      %s39 = sphi 0, %s29
    $region4: #{tpu_custom_call.1} parent=1 // loop_header_branch
      %20 = sbr.rel (%p18) target = $region8
    $region5: #{tpu_custom_call.1} parent=1 // loop_body
      %s22 = ssub.s32 %s17, 1
      %s23 = sadd.s32 %s17, 1
      %s24 = ssub.s32 %s17, %s23
      %p25 = scmp.eq.s32.totalorder %s24, 0
      %s27 = sadd.s32 %s26, 1
      %s28 = scalar_select %p25, %s26, %s27
      %p30 = pneg %p25
      %p31 = scmp.eq.s32.totalorder %s17, 1
      %p32 = por %p30, %p31
      %p33 = scmp.ne.s32.totalorder %s26, %s29
      %p34 = scmp.eq.s32.totalorder %s17, 0
      %p35 = por %p33, %p34
      %p36 = scmp.ne.s32.totalorder %s26, %s29
      %p37 = scmp.eq.s32.totalorder %s22, 1
      %p38 = por %p36, %p37
      %p40 = scmp.ne.s32.totalorder %s29, %s39
      %p41 = scmp.eq.s32.totalorder %s22, 0
      %p42 = por %p40, %p41
      %p43 = scmp.lt.s32.totalorder %s17, 2
      // Predicated region
      $region9: #{tpu_custom_call.1} parent=5 // pred_check
        %p44 = pneg %p43
      $region10: #{tpu_custom_call.1} parent=5 // pred_check_branch
        %46 = sbr.rel (%p44) target = $region12
      $region11: #{tpu_custom_call.1} parent=5 // pred_region
        %p47 = pneg %p35
        %p48 = pneg %p32
        %s49 = sand.u32 %s26, 1
        %s50 = scalar_lea.sflag [#allocation7], %s49
        %s51 = sand.u32 %s26, 1
        %s52 = smul.addr %s51, 8
        %s53 = scalar_lea.vmem [#allocation6], %s52
        %s54 = smul.u32 %s17, 8
        %s55 = sld [smem:[#allocation5 + %s54]]
        %s56 = scalar_lea.vmem %s1, %s55
        %p58 = scmp.lt.u32.totalorder 1, 8
        %p59 = pneg %p58
        // Predicated region
        $region13: #{tpu_custom_call.1} parent=11 // pred_check
          _
        $region14: #{tpu_custom_call.1} parent=11 // pred_check_branch
          %61 = sbr.rel (%p58) target = $region16
        $region15: #{tpu_custom_call.1} parent=11 // pred_region
          %s77 = sand.u32 1, 7
          %p78 = scmp.eq.s32.totalorder %s77, 0
          %p79 = pneg %p78
          // Predicated region
          $region28: #{tpu_custom_call.1} parent=15 // pred_check
            _
          $region29: #{tpu_custom_call.1} parent=15 // pred_check_branch
            %81 = sbr.rel (%p78) target = $region31
          $region30: #{tpu_custom_call.1} parent=15 // pred_region
            %s82 = sand.u32 1, 7
            %s83 = ssub.s32 1, %s82
            %s84 = scalar_lea.vmem %s56, %s83
            %s85 = ssub.s32 1, %s82
            %s86 = scalar_lea.vmem [#allocation2], %s85
            %s87 = sshll.u32 1, %s82
            %s88 = ssub.s32 %s87, 1
            loop: start=0, step=1, limit=1
            $region32: #{tpu_custom_call.1} parent=30 // loop_pre_header
              _
            $region33: #{tpu_custom_call.1} parent=30 // loop_header
              %s90 = sphi 0, %s94
              %p91 = scmp.ge.s32.totalorder %s90, 1
              %s95 = sphi %s84, %s84
              %s96 = sphi %s86, %s86
            $region34: #{tpu_custom_call.1} parent=30 // loop_header_branch
              %93 = sbr.rel (%p91) target = $region38
            $region35: #{tpu_custom_call.1} parent=30 // loop_body
              %v97 = vld [vmem:[%s95] sm:%s88]
              %98 = vst [vmem:[%s96] sm:%s88] %v97
            $region36: #{tpu_custom_call.1} parent=30 // loop_footer
              %s94 = sadd.s32 1, %s90
            $region37: #{tpu_custom_call.1} parent=30 // loop_footer_branch
              %89 = sbr.rel target = $region33
            $region38: #{tpu_custom_call.1} parent=30 // loop_exit
              _
          $region31: #{tpu_custom_call.1} parent=15 // pred_fallthru
            _
        $region16: #{tpu_custom_call.1} parent=11 // pred_fallthru
          _
        // Predicated region
        $region17: #{tpu_custom_call.1} parent=11 // pred_check
          %p62 = pneg %p58
        $region18: #{tpu_custom_call.1} parent=11 // pred_check_branch
          %64 = sbr.rel (%p62) target = $region20
        $region19: #{tpu_custom_call.1} parent=11 // pred_region
          %s65 = sshll.u32 1, 1
          %s66 = ssub.s32 %s65, 1
          loop: start=0, step=1, limit=1
          $region21: #{tpu_custom_call.1} parent=19 // loop_pre_header
            _
          $region22: #{tpu_custom_call.1} parent=19 // loop_header
            %s68 = sphi 0, %s72
            %p69 = scmp.ge.s32.totalorder %s68, 1
            %s73 = sphi %s56, %s56
            %s74 = sphi [#allocation2], [#allocation2]
          $region23: #{tpu_custom_call.1} parent=19 // loop_header_branch
            %71 = sbr.rel (%p69) target = $region27
          $region24: #{tpu_custom_call.1} parent=19 // loop_body
            %v75 = vld [vmem:[%s73] sm:%s66]
            %76 = vst [vmem:[%s74] sm:%s66] %v75
          $region25: #{tpu_custom_call.1} parent=19 // loop_footer
            %s72 = sadd.s32 1, %s68
          $region26: #{tpu_custom_call.1} parent=19 // loop_footer_branch
            %67 = sbr.rel target = $region22
          $region27: #{tpu_custom_call.1} parent=19 // loop_exit
            _
        $region20: #{tpu_custom_call.1} parent=11 // pred_fallthru
          _
        // Predicated region
        $region39: #{tpu_custom_call.1} parent=11 // pred_check
          _
        $region40: #{tpu_custom_call.1} parent=11 // pred_check_branch
          %101 = sbr.rel (0) target = $region42
        $region41: #{tpu_custom_call.1} parent=11 // pred_region
          %102 = vsyncadd [#allocation3], 16
        $region42: #{tpu_custom_call.1} parent=11 // pred_fallthru
          _
        %s103 = sadd.s32 %s54, 1
        %s104 = sld [smem:[#allocation5 + %s103]]
        %s105 = scalar_lea.vmem %s1, %s104
        %s106 = scalar_lea.vmem [#allocation2], 1
        %s107 = scalar_lea.sflag [#allocation3], 1
        %p109 = scmp.lt.u32.totalorder 1, 8
        %p110 = pneg %p109
        // Predicated region
        $region43: #{tpu_custom_call.1} parent=11 // pred_check
          _
        $region44: #{tpu_custom_call.1} parent=11 // pred_check_branch
          %112 = sbr.rel (%p109) target = $region46
        $region45: #{tpu_custom_call.1} parent=11 // pred_region
          %s128 = sand.u32 1, 7
          %p129 = scmp.eq.s32.totalorder %s128, 0
          %p130 = pneg %p129
          // Predicated region
          $region58: #{tpu_custom_call.1} parent=45 // pred_check
            _
          $region59: #{tpu_custom_call.1} parent=45 // pred_check_branch
            %132 = sbr.rel (%p129) target = $region61
          $region60: #{tpu_custom_call.1} parent=45 // pred_region
            %s133 = sand.u32 1, 7
            %s134 = ssub.s32 1, %s133
            %s135 = scalar_lea.vmem %s105, %s134
            %s136 = ssub.s32 1, %s133
            %s137 = scalar_lea.vmem %s106, %s136 [#allocation2]
            %s138 = sshll.u32 1, %s133
            %s139 = ssub.s32 %s138, 1
            loop: start=0, step=1, limit=1
            $region62: #{tpu_custom_call.1} parent=60 // loop_pre_header
              _
            $region63: #{tpu_custom_call.1} parent=60 // loop_header
              %s141 = sphi 0, %s145
              %p142 = scmp.ge.s32.totalorder %s141, 1
              %s146 = sphi %s135, %s135
              %s147 = sphi %s137, %s137
            $region64: #{tpu_custom_call.1} parent=60 // loop_header_branch
              %144 = sbr.rel (%p142) target = $region68
            $region65: #{tpu_custom_call.1} parent=60 // loop_body
              %v148 = vld [vmem:[%s146] sm:%s139]
              %149 = vst [vmem:[%s147] sm:%s139] %v148
            $region66: #{tpu_custom_call.1} parent=60 // loop_footer
              %s145 = sadd.s32 1, %s141
            $region67: #{tpu_custom_call.1} parent=60 // loop_footer_branch
              %140 = sbr.rel target = $region63
            $region68: #{tpu_custom_call.1} parent=60 // loop_exit
              _
          $region61: #{tpu_custom_call.1} parent=45 // pred_fallthru
            _
        $region46: #{tpu_custom_call.1} parent=11 // pred_fallthru
          _
        // Predicated region
        $region47: #{tpu_custom_call.1} parent=11 // pred_check
          %p113 = pneg %p109
        $region48: #{tpu_custom_call.1} parent=11 // pred_check_branch
          %115 = sbr.rel (%p113) target = $region50
        $region49: #{tpu_custom_call.1} parent=11 // pred_region
          %s116 = sshll.u32 1, 1
          %s117 = ssub.s32 %s116, 1
          loop: start=0, step=1, limit=1
          $region51: #{tpu_custom_call.1} parent=49 // loop_pre_header
            _
          $region52: #{tpu_custom_call.1} parent=49 // loop_header
            %s119 = sphi 0, %s123
            %p120 = scmp.ge.s32.totalorder %s119, 1
            %s124 = sphi %s105, %s105
            %s125 = sphi %s106, %s106
          $region53: #{tpu_custom_call.1} parent=49 // loop_header_branch
            %122 = sbr.rel (%p120) target = $region57
          $region54: #{tpu_custom_call.1} parent=49 // loop_body
            %v126 = vld [vmem:[%s124] sm:%s117]
            %127 = vst [vmem:[%s125] sm:%s117] %v126
          $region55: #{tpu_custom_call.1} parent=49 // loop_footer
            %s123 = sadd.s32 1, %s119
          $region56: #{tpu_custom_call.1} parent=49 // loop_footer_branch
            %118 = sbr.rel target = $region52
          $region57: #{tpu_custom_call.1} parent=49 // loop_exit
            _
        $region50: #{tpu_custom_call.1} parent=11 // pred_fallthru
          _
        // Predicated region
        $region69: #{tpu_custom_call.1} parent=11 // pred_check
          _
        $region70: #{tpu_custom_call.1} parent=11 // pred_check_branch
          %152 = sbr.rel (0) target = $region72
        $region71: #{tpu_custom_call.1} parent=11 // pred_region
          %153 = vsyncadd %s107, 16
        $region72: #{tpu_custom_call.1} parent=11 // pred_fallthru
          _
        %s154 = sadd.s32 %s54, 2
        %s155 = sld [smem:[#allocation5 + %s154]]
        %s156 = scalar_lea.vmem %s1, %s155
        %s157 = scalar_lea.vmem [#allocation2], 2
        %s158 = scalar_lea.sflag [#allocation3], 2
        %p160 = scmp.lt.u32.totalorder 1, 8
        %p161 = pneg %p160
        // Predicated region
        $region73: #{tpu_custom_call.1} parent=11 // pred_check
          _
        $region74: #{tpu_custom_call.1} parent=11 // pred_check_branch
          %163 = sbr.rel (%p160) target = $region76
        $region75: #{tpu_custom_call.1} parent=11 // pred_region
          %s179 = sand.u32 1, 7
          %p180 = scmp.eq.s32.totalorder %s179, 0
          %p181 = pneg %p180
          // Predicated region
          $region88: #{tpu_custom_call.1} parent=75 // pred_check
            _
          $region89: #{tpu_custom_call.1} parent=75 // pred_check_branch
            %183 = sbr.rel (%p180) target = $region91
          $region90: #{tpu_custom_call.1} parent=75 // pred_region
            %s184 = sand.u32 1, 7
            %s185 = ssub.s32 1, %s184
            %s186 = scalar_lea.vmem %s156, %s185
            %s187 = ssub.s32 1, %s184
            %s188 = scalar_lea.vmem %s157, %s187 [#allocation2]
            %s189 = sshll.u32 1, %s184
            %s190 = ssub.s32 %s189, 1
            loop: start=0, step=1, limit=1
            $region92: #{tpu_custom_call.1} parent=90 // loop_pre_header
              _
            $region93: #{tpu_custom_call.1} parent=90 // loop_header
              %s192 = sphi 0, %s196
              %p193 = scmp.ge.s32.totalorder %s192, 1
              %s197 = sphi %s186, %s186
              %s198 = sphi %s188, %s188
            $region94: #{tpu_custom_call.1} parent=90 // loop_header_branch
              %195 = sbr.rel (%p193) target = $region98
            $region95: #{tpu_custom_call.1} parent=90 // loop_body
              %v199 = vld [vmem:[%s197] sm:%s190]
              %200 = vst [vmem:[%s198] sm:%s190] %v199
            $region96: #{tpu_custom_call.1} parent=90 // loop_footer
              %s196 = sadd.s32 1, %s192
            $region97: #{tpu_custom_call.1} parent=90 // loop_footer_branch
              %191 = sbr.rel target = $region93
            $region98: #{tpu_custom_call.1} parent=90 // loop_exit
              _
          $region91: #{tpu_custom_call.1} parent=75 // pred_fallthru
            _
        $region76: #{tpu_custom_call.1} parent=11 // pred_fallthru
          _
        // Predicated region
        $region77: #{tpu_custom_call.1} parent=11 // pred_check
          %p164 = pneg %p160
        $region78: #{tpu_custom_call.1} parent=11 // pred_check_branch
          %166 = sbr.rel (%p164) target = $region80
        $region79: #{tpu_custom_call.1} parent=11 // pred_region
          %s167 = sshll.u32 1, 1
          %s168 = ssub.s32 %s167, 1
          loop: start=0, step=1, limit=1
          $region81: #{tpu_custom_call.1} parent=79 // loop_pre_header
            _
          $region82: #{tpu_custom_call.1} parent=79 // loop_header
            %s170 = sphi 0, %s174
            %p171 = scmp.ge.s32.totalorder %s170, 1
            %s175 = sphi %s156, %s156
            %s176 = sphi %s157, %s157
          $region83: #{tpu_custom_call.1} parent=79 // loop_header_branch
            %173 = sbr.rel (%p171) target = $region87
          $region84: #{tpu_custom_call.1} parent=79 // loop_body
            %v177 = vld [vmem:[%s175] sm:%s168]
            %178 = vst [vmem:[%s176] sm:%s168] %v177
          $region85: #{tpu_custom_call.1} parent=79 // loop_footer
            %s174 = sadd.s32 1, %s170
          $region86: #{tpu_custom_call.1} parent=79 // loop_footer_branch
            %169 = sbr.rel target = $region82
          $region87: #{tpu_custom_call.1} parent=79 // loop_exit
            _
        $region80: #{tpu_custom_call.1} parent=11 // pred_fallthru
          _
        // Predicated region
        $region99: #{tpu_custom_call.1} parent=11 // pred_check
          _
        $region100: #{tpu_custom_call.1} parent=11 // pred_check_branch
          %203 = sbr.rel (0) target = $region102
        $region101: #{tpu_custom_call.1} parent=11 // pred_region
          %204 = vsyncadd %s158, 16
        $region102: #{tpu_custom_call.1} parent=11 // pred_fallthru
          _
        %s205 = sadd.s32 %s54, 3
        %s206 = sld [smem:[#allocation5 + %s205]]
        %s207 = scalar_lea.vmem %s1, %s206
        %s208 = scalar_lea.vmem [#allocation2], 3
        %s209 = scalar_lea.sflag [#allocation3], 3
        %p211 = scmp.lt.u32.totalorder 1, 8
        %p212 = pneg %p211
        // Predicated region
        $region103: #{tpu_custom_call.1} parent=11 // pred_check
          _
        $region104: #{tpu_custom_call.1} parent=11 // pred_check_branch
          %214 = sbr.rel (%p211) target = $region106
        $region105: #{tpu_custom_call.1} parent=11 // pred_region
          %s230 = sand.u32 1, 7
          %p231 = scmp.eq.s32.totalorder %s230, 0
          %p232 = pneg %p231
          // Predicated region
          $region118: #{tpu_custom_call.1} parent=105 // pred_check
            _
          $region119: #{tpu_custom_call.1} parent=105 // pred_check_branch
            %234 = sbr.rel (%p231) target = $region121
          $region120: #{tpu_custom_call.1} parent=105 // pred_region
            %s235 = sand.u32 1, 7
            %s236 = ssub.s32 1, %s235
            %s237 = scalar_lea.vmem %s207, %s236
            %s238 = ssub.s32 1, %s235
            %s239 = scalar_lea.vmem %s208, %s238 [#allocation2]
            %s240 = sshll.u32 1, %s235
            %s241 = ssub.s32 %s240, 1
            loop: start=0, step=1, limit=1
            $region122: #{tpu_custom_call.1} parent=120 // loop_pre_header
              _
            $region123: #{tpu_custom_call.1} parent=120 // loop_header
              %s243 = sphi 0, %s247
              %p244 = scmp.ge.s32.totalorder %s243, 1
              %s248 = sphi %s237, %s237
              %s249 = sphi %s239, %s239
            $region124: #{tpu_custom_call.1} parent=120 // loop_header_branch
              %246 = sbr.rel (%p244) target = $region128
            $region125: #{tpu_custom_call.1} parent=120 // loop_body
              %v250 = vld [vmem:[%s248] sm:%s241]
              %251 = vst [vmem:[%s249] sm:%s241] %v250
            $region126: #{tpu_custom_call.1} parent=120 // loop_footer
              %s247 = sadd.s32 1, %s243
            $region127: #{tpu_custom_call.1} parent=120 // loop_footer_branch
              %242 = sbr.rel target = $region123
            $region128: #{tpu_custom_call.1} parent=120 // loop_exit
              _
          $region121: #{tpu_custom_call.1} parent=105 // pred_fallthru
            _
        $region106: #{tpu_custom_call.1} parent=11 // pred_fallthru
          _
        // Predicated region
        $region107: #{tpu_custom_call.1} parent=11 // pred_check
          %p215 = pneg %p211
        $region108: #{tpu_custom_call.1} parent=11 // pred_check_branch
          %217 = sbr.rel (%p215) target = $region110
        $region109: #{tpu_custom_call.1} parent=11 // pred_region
          %s218 = sshll.u32 1, 1
          %s219 = ssub.s32 %s218, 1
          loop: start=0, step=1, limit=1
          $region111: #{tpu_custom_call.1} parent=109 // loop_pre_header
            _
          $region112: #{tpu_custom_call.1} parent=109 // loop_header
            %s221 = sphi 0, %s225
            %p222 = scmp.ge.s32.totalorder %s221, 1
            %s226 = sphi %s207, %s207
            %s227 = sphi %s208, %s208
          $region113: #{tpu_custom_call.1} parent=109 // loop_header_branch
            %224 = sbr.rel (%p222) target = $region117
          $region114: #{tpu_custom_call.1} parent=109 // loop_body
            %v228 = vld [vmem:[%s226] sm:%s219]
            %229 = vst [vmem:[%s227] sm:%s219] %v228
          $region115: #{tpu_custom_call.1} parent=109 // loop_footer
            %s225 = sadd.s32 1, %s221
          $region116: #{tpu_custom_call.1} parent=109 // loop_footer_branch
            %220 = sbr.rel target = $region112
          $region117: #{tpu_custom_call.1} parent=109 // loop_exit
            _
        $region110: #{tpu_custom_call.1} parent=11 // pred_fallthru
          _
        // Predicated region
        $region129: #{tpu_custom_call.1} parent=11 // pred_check
          _
        $region130: #{tpu_custom_call.1} parent=11 // pred_check_branch
          %254 = sbr.rel (0) target = $region132
        $region131: #{tpu_custom_call.1} parent=11 // pred_region
          %255 = vsyncadd %s209, 16
        $region132: #{tpu_custom_call.1} parent=11 // pred_fallthru
          _
        %s256 = sadd.s32 %s54, 4
        %s257 = sld [smem:[#allocation5 + %s256]]
        %s258 = scalar_lea.vmem %s1, %s257
        %s259 = scalar_lea.vmem [#allocation2], 4
        %s260 = scalar_lea.sflag [#allocation3], 4
        %p262 = scmp.lt.u32.totalorder 1, 8
        %p263 = pneg %p262
        // Predicated region
        $region133: #{tpu_custom_call.1} parent=11 // pred_check
          _
        $region134: #{tpu_custom_call.1} parent=11 // pred_check_branch
          %265 = sbr.rel (%p262) target = $region136
        $region135: #{tpu_custom_call.1} parent=11 // pred_region
          %s281 = sand.u32 1, 7
          %p282 = scmp.eq.s32.totalorder %s281, 0
          %p283 = pneg %p282
          // Predicated region
          $region148: #{tpu_custom_call.1} parent=135 // pred_check
            _
          $region149: #{tpu_custom_call.1} parent=135 // pred_check_branch
            %285 = sbr.rel (%p282) target = $region151
          $region150: #{tpu_custom_call.1} parent=135 // pred_region
            %s286 = sand.u32 1, 7
            %s287 = ssub.s32 1, %s286
            %s288 = scalar_lea.vmem %s258, %s287
            %s289 = ssub.s32 1, %s286
            %s290 = scalar_lea.vmem %s259, %s289 [#allocation2]
            %s291 = sshll.u32 1, %s286
            %s292 = ssub.s32 %s291, 1
            loop: start=0, step=1, limit=1
            $region152: #{tpu_custom_call.1} parent=150 // loop_pre_header
              _
            $region153: #{tpu_custom_call.1} parent=150 // loop_header
              %s294 = sphi 0, %s298
              %p295 = scmp.ge.s32.totalorder %s294, 1
              %s299 = sphi %s288, %s288
              %s300 = sphi %s290, %s290
            $region154: #{tpu_custom_call.1} parent=150 // loop_header_branch
              %297 = sbr.rel (%p295) target = $region158
            $region155: #{tpu_custom_call.1} parent=150 // loop_body
              %v301 = vld [vmem:[%s299] sm:%s292]
              %302 = vst [vmem:[%s300] sm:%s292] %v301
            $region156: #{tpu_custom_call.1} parent=150 // loop_footer
              %s298 = sadd.s32 1, %s294
            $region157: #{tpu_custom_call.1} parent=150 // loop_footer_branch
              %293 = sbr.rel target = $region153
            $region158: #{tpu_custom_call.1} parent=150 // loop_exit
              _
          $region151: #{tpu_custom_call.1} parent=135 // pred_fallthru
            _
        $region136: #{tpu_custom_call.1} parent=11 // pred_fallthru
          _
        // Predicated region
        $region137: #{tpu_custom_call.1} parent=11 // pred_check
          %p266 = pneg %p262
        $region138: #{tpu_custom_call.1} parent=11 // pred_check_branch
          %268 = sbr.rel (%p266) target = $region140
        $region139: #{tpu_custom_call.1} parent=11 // pred_region
          %s269 = sshll.u32 1, 1
          %s270 = ssub.s32 %s269, 1
          loop: start=0, step=1, limit=1
          $region141: #{tpu_custom_call.1} parent=139 // loop_pre_header
            _
          $region142: #{tpu_custom_call.1} parent=139 // loop_header
            %s272 = sphi 0, %s276
            %p273 = scmp.ge.s32.totalorder %s272, 1
            %s277 = sphi %s258, %s258
            %s278 = sphi %s259, %s259
          $region143: #{tpu_custom_call.1} parent=139 // loop_header_branch
            %275 = sbr.rel (%p273) target = $region147
          $region144: #{tpu_custom_call.1} parent=139 // loop_body
            %v279 = vld [vmem:[%s277] sm:%s270]
            %280 = vst [vmem:[%s278] sm:%s270] %v279
          $region145: #{tpu_custom_call.1} parent=139 // loop_footer
            %s276 = sadd.s32 1, %s272
          $region146: #{tpu_custom_call.1} parent=139 // loop_footer_branch
            %271 = sbr.rel target = $region142
          $region147: #{tpu_custom_call.1} parent=139 // loop_exit
            _
        $region140: #{tpu_custom_call.1} parent=11 // pred_fallthru
          _
        // Predicated region
        $region159: #{tpu_custom_call.1} parent=11 // pred_check
          _
        $region160: #{tpu_custom_call.1} parent=11 // pred_check_branch
          %305 = sbr.rel (0) target = $region162
        $region161: #{tpu_custom_call.1} parent=11 // pred_region
          %306 = vsyncadd %s260, 16
        $region162: #{tpu_custom_call.1} parent=11 // pred_fallthru
          _
        %s307 = sadd.s32 %s54, 5
        %s308 = sld [smem:[#allocation5 + %s307]]
        %s309 = scalar_lea.vmem %s1, %s308
        %s310 = scalar_lea.vmem [#allocation2], 5
        %s311 = scalar_lea.sflag [#allocation3], 5
        %p313 = scmp.lt.u32.totalorder 1, 8
        %p314 = pneg %p313
        // Predicated region
        $region163: #{tpu_custom_call.1} parent=11 // pred_check
          _
        $region164: #{tpu_custom_call.1} parent=11 // pred_check_branch
          %316 = sbr.rel (%p313) target = $region166
        $region165: #{tpu_custom_call.1} parent=11 // pred_region
          %s332 = sand.u32 1, 7
          %p333 = scmp.eq.s32.totalorder %s332, 0
          %p334 = pneg %p333
          // Predicated region
          $region178: #{tpu_custom_call.1} parent=165 // pred_check
            _
          $region179: #{tpu_custom_call.1} parent=165 // pred_check_branch
            %336 = sbr.rel (%p333) target = $region181
          $region180: #{tpu_custom_call.1} parent=165 // pred_region
            %s337 = sand.u32 1, 7
            %s338 = ssub.s32 1, %s337
            %s339 = scalar_lea.vmem %s309, %s338
            %s340 = ssub.s32 1, %s337
            %s341 = scalar_lea.vmem %s310, %s340 [#allocation2]
            %s342 = sshll.u32 1, %s337
            %s343 = ssub.s32 %s342, 1
            loop: start=0, step=1, limit=1
            $region182: #{tpu_custom_call.1} parent=180 // loop_pre_header
              _
            $region183: #{tpu_custom_call.1} parent=180 // loop_header
              %s345 = sphi 0, %s349
              %p346 = scmp.ge.s32.totalorder %s345, 1
              %s350 = sphi %s339, %s339
              %s351 = sphi %s341, %s341
            $region184: #{tpu_custom_call.1} parent=180 // loop_header_branch
              %348 = sbr.rel (%p346) target = $region188
            $region185: #{tpu_custom_call.1} parent=180 // loop_body
              %v352 = vld [vmem:[%s350] sm:%s343]
              %353 = vst [vmem:[%s351] sm:%s343] %v352
            $region186: #{tpu_custom_call.1} parent=180 // loop_footer
              %s349 = sadd.s32 1, %s345
            $region187: #{tpu_custom_call.1} parent=180 // loop_footer_branch
              %344 = sbr.rel target = $region183
            $region188: #{tpu_custom_call.1} parent=180 // loop_exit
              _
          $region181: #{tpu_custom_call.1} parent=165 // pred_fallthru
            _
        $region166: #{tpu_custom_call.1} parent=11 // pred_fallthru
          _
        // Predicated region
        $region167: #{tpu_custom_call.1} parent=11 // pred_check
          %p317 = pneg %p313
        $region168: #{tpu_custom_call.1} parent=11 // pred_check_branch
          %319 = sbr.rel (%p317) target = $region170
        $region169: #{tpu_custom_call.1} parent=11 // pred_region
          %s320 = sshll.u32 1, 1
          %s321 = ssub.s32 %s320, 1
          loop: start=0, step=1, limit=1
          $region171: #{tpu_custom_call.1} parent=169 // loop_pre_header
            _
          $region172: #{tpu_custom_call.1} parent=169 // loop_header
            %s323 = sphi 0, %s327
            %p324 = scmp.ge.s32.totalorder %s323, 1
            %s328 = sphi %s309, %s309
            %s329 = sphi %s310, %s310
          $region173: #{tpu_custom_call.1} parent=169 // loop_header_branch
            %326 = sbr.rel (%p324) target = $region177
          $region174: #{tpu_custom_call.1} parent=169 // loop_body
            %v330 = vld [vmem:[%s328] sm:%s321]
            %331 = vst [vmem:[%s329] sm:%s321] %v330
          $region175: #{tpu_custom_call.1} parent=169 // loop_footer
            %s327 = sadd.s32 1, %s323
          $region176: #{tpu_custom_call.1} parent=169 // loop_footer_branch
            %322 = sbr.rel target = $region172
          $region177: #{tpu_custom_call.1} parent=169 // loop_exit
            _
        $region170: #{tpu_custom_call.1} parent=11 // pred_fallthru
          _
        // Predicated region
        $region189: #{tpu_custom_call.1} parent=11 // pred_check
          _
        $region190: #{tpu_custom_call.1} parent=11 // pred_check_branch
          %356 = sbr.rel (0) target = $region192
        $region191: #{tpu_custom_call.1} parent=11 // pred_region
          %357 = vsyncadd %s311, 16
        $region192: #{tpu_custom_call.1} parent=11 // pred_fallthru
          _
        %s358 = sadd.s32 %s54, 6
        %s359 = sld [smem:[#allocation5 + %s358]]
        %s360 = scalar_lea.vmem %s1, %s359
        %s361 = scalar_lea.vmem [#allocation2], 6
        %s362 = scalar_lea.sflag [#allocation3], 6
        %p364 = scmp.lt.u32.totalorder 1, 8
        %p365 = pneg %p364
        // Predicated region
        $region193: #{tpu_custom_call.1} parent=11 // pred_check
          _
        $region194: #{tpu_custom_call.1} parent=11 // pred_check_branch
          %367 = sbr.rel (%p364) target = $region196
        $region195: #{tpu_custom_call.1} parent=11 // pred_region
          %s383 = sand.u32 1, 7
          %p384 = scmp.eq.s32.totalorder %s383, 0
          %p385 = pneg %p384
          // Predicated region
          $region208: #{tpu_custom_call.1} parent=195 // pred_check
            _
          $region209: #{tpu_custom_call.1} parent=195 // pred_check_branch
            %387 = sbr.rel (%p384) target = $region211
          $region210: #{tpu_custom_call.1} parent=195 // pred_region
            %s388 = sand.u32 1, 7
            %s389 = ssub.s32 1, %s388
            %s390 = scalar_lea.vmem %s360, %s389
            %s391 = ssub.s32 1, %s388
            %s392 = scalar_lea.vmem %s361, %s391 [#allocation2]
            %s393 = sshll.u32 1, %s388
            %s394 = ssub.s32 %s393, 1
            loop: start=0, step=1, limit=1
            $region212: #{tpu_custom_call.1} parent=210 // loop_pre_header
              _
            $region213: #{tpu_custom_call.1} parent=210 // loop_header
              %s396 = sphi 0, %s400
              %p397 = scmp.ge.s32.totalorder %s396, 1
              %s401 = sphi %s390, %s390
              %s402 = sphi %s392, %s392
            $region214: #{tpu_custom_call.1} parent=210 // loop_header_branch
              %399 = sbr.rel (%p397) target = $region218
            $region215: #{tpu_custom_call.1} parent=210 // loop_body
              %v403 = vld [vmem:[%s401] sm:%s394]
              %404 = vst [vmem:[%s402] sm:%s394] %v403
            $region216: #{tpu_custom_call.1} parent=210 // loop_footer
              %s400 = sadd.s32 1, %s396
            $region217: #{tpu_custom_call.1} parent=210 // loop_footer_branch
              %395 = sbr.rel target = $region213
            $region218: #{tpu_custom_call.1} parent=210 // loop_exit
              _
          $region211: #{tpu_custom_call.1} parent=195 // pred_fallthru
            _
        $region196: #{tpu_custom_call.1} parent=11 // pred_fallthru
          _
        // Predicated region
        $region197: #{tpu_custom_call.1} parent=11 // pred_check
          %p368 = pneg %p364
        $region198: #{tpu_custom_call.1} parent=11 // pred_check_branch
          %370 = sbr.rel (%p368) target = $region200
        $region199: #{tpu_custom_call.1} parent=11 // pred_region
          %s371 = sshll.u32 1, 1
          %s372 = ssub.s32 %s371, 1
          loop: start=0, step=1, limit=1
          $region201: #{tpu_custom_call.1} parent=199 // loop_pre_header
            _
          $region202: #{tpu_custom_call.1} parent=199 // loop_header
            %s374 = sphi 0, %s378
            %p375 = scmp.ge.s32.totalorder %s374, 1
            %s379 = sphi %s360, %s360
            %s380 = sphi %s361, %s361
          $region203: #{tpu_custom_call.1} parent=199 // loop_header_branch
            %377 = sbr.rel (%p375) target = $region207
          $region204: #{tpu_custom_call.1} parent=199 // loop_body
            %v381 = vld [vmem:[%s379] sm:%s372]
            %382 = vst [vmem:[%s380] sm:%s372] %v381
          $region205: #{tpu_custom_call.1} parent=199 // loop_footer
            %s378 = sadd.s32 1, %s374
          $region206: #{tpu_custom_call.1} parent=199 // loop_footer_branch
            %373 = sbr.rel target = $region202
          $region207: #{tpu_custom_call.1} parent=199 // loop_exit
            _
        $region200: #{tpu_custom_call.1} parent=11 // pred_fallthru
          _
        // Predicated region
        $region219: #{tpu_custom_call.1} parent=11 // pred_check
          _
        $region220: #{tpu_custom_call.1} parent=11 // pred_check_branch
          %407 = sbr.rel (0) target = $region222
        $region221: #{tpu_custom_call.1} parent=11 // pred_region
          %408 = vsyncadd %s362, 16
        $region222: #{tpu_custom_call.1} parent=11 // pred_fallthru
          _
        %s409 = sadd.s32 %s54, 7
        %s410 = sld [smem:[#allocation5 + %s409]]
        %s411 = scalar_lea.vmem %s1, %s410
        %s412 = scalar_lea.vmem [#allocation2], 7
        %s413 = scalar_lea.sflag [#allocation3], 7
        %p415 = scmp.lt.u32.totalorder 1, 8
        %p416 = pneg %p415
        // Predicated region
        $region223: #{tpu_custom_call.1} parent=11 // pred_check
          _
        $region224: #{tpu_custom_call.1} parent=11 // pred_check_branch
          %418 = sbr.rel (%p415) target = $region226
        $region225: #{tpu_custom_call.1} parent=11 // pred_region
          %s434 = sand.u32 1, 7
          %p435 = scmp.eq.s32.totalorder %s434, 0
          %p436 = pneg %p435
          // Predicated region
          $region238: #{tpu_custom_call.1} parent=225 // pred_check
            _
          $region239: #{tpu_custom_call.1} parent=225 // pred_check_branch
            %438 = sbr.rel (%p435) target = $region241
          $region240: #{tpu_custom_call.1} parent=225 // pred_region
            %s439 = sand.u32 1, 7
            %s440 = ssub.s32 1, %s439
            %s441 = scalar_lea.vmem %s411, %s440
            %s442 = ssub.s32 1, %s439
            %s443 = scalar_lea.vmem %s412, %s442 [#allocation2]
            %s444 = sshll.u32 1, %s439
            %s445 = ssub.s32 %s444, 1
            loop: start=0, step=1, limit=1
            $region242: #{tpu_custom_call.1} parent=240 // loop_pre_header
              _
            $region243: #{tpu_custom_call.1} parent=240 // loop_header
              %s447 = sphi 0, %s451
              %p448 = scmp.ge.s32.totalorder %s447, 1
              %s452 = sphi %s441, %s441
              %s453 = sphi %s443, %s443
            $region244: #{tpu_custom_call.1} parent=240 // loop_header_branch
              %450 = sbr.rel (%p448) target = $region248
            $region245: #{tpu_custom_call.1} parent=240 // loop_body
              %v454 = vld [vmem:[%s452] sm:%s445]
              %455 = vst [vmem:[%s453] sm:%s445] %v454
            $region246: #{tpu_custom_call.1} parent=240 // loop_footer
              %s451 = sadd.s32 1, %s447
            $region247: #{tpu_custom_call.1} parent=240 // loop_footer_branch
              %446 = sbr.rel target = $region243
            $region248: #{tpu_custom_call.1} parent=240 // loop_exit
              _
          $region241: #{tpu_custom_call.1} parent=225 // pred_fallthru
            _
        $region226: #{tpu_custom_call.1} parent=11 // pred_fallthru
          _
        // Predicated region
        $region227: #{tpu_custom_call.1} parent=11 // pred_check
          %p419 = pneg %p415
        $region228: #{tpu_custom_call.1} parent=11 // pred_check_branch
          %421 = sbr.rel (%p419) target = $region230
        $region229: #{tpu_custom_call.1} parent=11 // pred_region
          %s422 = sshll.u32 1, 1
          %s423 = ssub.s32 %s422, 1
          loop: start=0, step=1, limit=1
          $region231: #{tpu_custom_call.1} parent=229 // loop_pre_header
            _
          $region232: #{tpu_custom_call.1} parent=229 // loop_header
            %s425 = sphi 0, %s429
            %p426 = scmp.ge.s32.totalorder %s425, 1
            %s430 = sphi %s411, %s411
            %s431 = sphi %s412, %s412
          $region233: #{tpu_custom_call.1} parent=229 // loop_header_branch
            %428 = sbr.rel (%p426) target = $region237
          $region234: #{tpu_custom_call.1} parent=229 // loop_body
            %v432 = vld [vmem:[%s430] sm:%s423]
            %433 = vst [vmem:[%s431] sm:%s423] %v432
          $region235: #{tpu_custom_call.1} parent=229 // loop_footer
            %s429 = sadd.s32 1, %s425
          $region236: #{tpu_custom_call.1} parent=229 // loop_footer_branch
            %424 = sbr.rel target = $region232
          $region237: #{tpu_custom_call.1} parent=229 // loop_exit
            _
        $region230: #{tpu_custom_call.1} parent=11 // pred_fallthru
          _
        // Predicated region
        $region249: #{tpu_custom_call.1} parent=11 // pred_check
          _
        $region250: #{tpu_custom_call.1} parent=11 // pred_check_branch
          %458 = sbr.rel (0) target = $region252
        $region251: #{tpu_custom_call.1} parent=11 // pred_region
          %459 = vsyncadd %s413, 16
        $region252: #{tpu_custom_call.1} parent=11 // pred_fallthru
          _
        %s460 = smul.u32 1, 1
        %s461 = sshll.u32 %s460, 4
        %462 = dma.done [#allocation3], %s461
        %s463 = sshll.u32 %s460, 4
        %464 = dma.done %s107, %s463
        %s465 = sshll.u32 %s460, 4
        %466 = dma.done %s158, %s465
        %s467 = sshll.u32 %s460, 4
        %468 = dma.done %s209, %s467
        %s469 = sshll.u32 %s460, 4
        %470 = dma.done %s260, %s469
        %s471 = sshll.u32 %s460, 4
        %472 = dma.done %s311, %s471
        %s473 = sshll.u32 %s460, 4
        %474 = dma.done %s362, %s473
        %s475 = sshll.u32 %s460, 4
        %476 = dma.done %s413, %s475
        %v477 = vld [vmem:[#allocation2] sm:$0xff]
        %v478 = vmul.f32 %v477, 5.656854
        %vm479 = vcmask 261120
        %480 = vst.msk [vmem:[%s53] sm:$0xff] %vm479, %v478
        %s481 = sand.u32 %s26, 1
        %s482 = scalar_lea.sflag [#allocation7], %s481
        %s483 = sand.u32 %s26, 1
        %s484 = smul.addr %s483, 8
        %s485 = scalar_lea.vmem [#allocation6], %s484
        // Predicated region
        $region253: #{tpu_custom_call.1} parent=11 // pred_check
          %p486 = pneg %p32
        $region254: #{tpu_custom_call.1} parent=11 // pred_check_branch
          %488 = sbr.rel (%p486) target = $region256
        $region255: #{tpu_custom_call.1} parent=11 // pred_region
          %s490 = ssub.s32 128, 128
          %491 = vsyncadd %s482, %s490
          %s492 = smul.addr %s17, 128
          %s493 = scalar_lea.hbm %s2, %s492
          %s495 = sshll.u32 %s485, 4
          %s496 = int_to_ptr.vmem [resolvable:$true] %s495
          %498 = dma.vmem_to_hbm [thread:$0]  %s496, 128, %s493, %s482
        $region256: #{tpu_custom_call.1} parent=11 // pred_fallthru
          _
      $region12: #{tpu_custom_call.1} parent=5 // pred_fallthru
        _
      %p499 = scmp.le.s32.totalorder 1, %s17
      // Predicated region
      $region257: #{tpu_custom_call.1} parent=5 // pred_check
        %p500 = pneg %p499
      $region258: #{tpu_custom_call.1} parent=5 // pred_check_branch
        %502 = sbr.rel (%p500) target = $region260
      $region259: #{tpu_custom_call.1} parent=5 // pred_region
        %s503 = ssub.s32 %s17, 1
        // Predicated region
        $region261: #{tpu_custom_call.1} parent=259 // pred_check
          %p504 = pneg %p38
        $region262: #{tpu_custom_call.1} parent=259 // pred_check_branch
          %506 = sbr.rel (%p504) target = $region264
        $region263: #{tpu_custom_call.1} parent=259 // pred_region
          %s507 = sand.u32 %s29, 1
          %s508 = scalar_lea.sflag [#allocation7], %s507
          %s509 = sand.u32 %s29, 1
          %s510 = smul.addr %s509, 8
          %s511 = scalar_lea.vmem [#allocation6], %s510
          %512 = dma.done %s508, 128
        $region264: #{tpu_custom_call.1} parent=259 // pred_fallthru
          _
      $region260: #{tpu_custom_call.1} parent=5 // pred_fallthru
        _
    $region6: #{tpu_custom_call.1} parent=1 // loop_footer
      %s21 = sadd.s32 1, %s17
    $region7: #{tpu_custom_call.1} parent=1 // loop_footer_branch
      %16 = sbr.rel target = $region3
    $region8: #{tpu_custom_call.1} parent=1 // loop_exit
      _
    %513 = vsyncpa [#allocation7], 1
    %s514 = scalar_lea.sflag [#allocation7], 1
    %515 = vsyncpa %s514, 1
  %516 = vsyncmov [#allocation3]
  %s517 = vpop.sfrf %516
  %p518 = scmp.eq.s32.totalorder %s517, 0
  %p519 = pneg %p518
  %521 = shalt.err (%p519)
  %s522 = scalar_lea.sflag [#allocation3], 1
  %523 = vsyncmov %s522
  %s524 = vpop.sfrf %523
  %p525 = scmp.eq.s32.totalorder %s524, 0
  %p526 = pneg %p525
  %528 = shalt.err (%p526)
  %s529 = scalar_lea.sflag [#allocation3], 2
  %530 = vsyncmov %s529
  %s531 = vpop.sfrf %530
  %p532 = scmp.eq.s32.totalorder %s531, 0
  %p533 = pneg %p532
  %535 = shalt.err (%p533)
  %s536 = scalar_lea.sflag [#allocation3], 3
  %537 = vsyncmov %s536
  %s538 = vpop.sfrf %537
  %p539 = scmp.eq.s32.totalorder %s538, 0
  %p540 = pneg %p539
  %542 = shalt.err (%p540)
  %s543 = scalar_lea.sflag [#allocation3], 4
  %544 = vsyncmov %s543
  %s545 = vpop.sfrf %544
  %p546 = scmp.eq.s32.totalorder %s545, 0
  %p547 = pneg %p546
  %549 = shalt.err (%p547)
  %s550 = scalar_lea.sflag [#allocation3], 5
  %551 = vsyncmov %s550
  %s552 = vpop.sfrf %551
  %p553 = scmp.eq.s32.totalorder %s552, 0
  %p554 = pneg %p553
  %556 = shalt.err (%p554)
  %s557 = scalar_lea.sflag [#allocation3], 6
  %558 = vsyncmov %s557
  %s559 = vpop.sfrf %558
  %p560 = scmp.eq.s32.totalorder %s559, 0
  %p561 = pneg %p560
  %563 = shalt.err (%p561)
  %s564 = scalar_lea.sflag [#allocation3], 7
  %565 = vsyncmov %s564
  %s566 = vpop.sfrf %565
  %p567 = scmp.eq.s32.totalorder %s566, 0
  %p568 = pneg %p567
  %570 = shalt.err (%p568)

</llo_original>
